<compile_context>
chip_gen: v7x
topology: tpu7x:2x2x1
jax: 0.10.0
libtpu: 0.0.40
codegen_flags: <defaults>
</compile_context>

<pallas_src>
import functools

import numpy as np
import jax
import jax.numpy as jnp
from jax.experimental import pallas as pl
from jax.experimental.pallas import tpu as pltpu


SUBLANES = 8     # f32 sublane tile
LANES = 128      # lane tile


# ----------------------------- Pallas kernel --------------------------------

def geant2gcn_kernel(x_ref, p_ref, q_ref, *, c1, c2, c3, c4):
    """Fused forward for one batch tile.

    x_ref : (tile_b, c1)  sample-major slab, column n*dim_input + d.
    p_ref : (rows_pad, 128) packed params:
            rows [0:c1)          kron(adj.T, W1)          (c1, c2)
            rows [c1:c1+c2)      kron(adj.T, W2)          (c2, c3)
            rows [...:+c3)       Wfc                      (c3, c4)
            rows [...:+c4)       Wout (lane-padded)       (c4, 128)
            next 4 rows          b1, b2, bfc, bout (lane-padded)
    q_ref : (tile_b, 128)  lane-padded Q-values (useful lanes [0:N)).
    """
    p = p_ref[...]
    r = 0
    m1 = p[r:r + c1, :c2]; r += c1
    m2 = p[r:r + c2, :c3]; r += c2
    wfc = p[r:r + c3, :c4]; r += c3
    wout = p[r:r + c4, :]; r += c4
    b1 = p[r:r + 1, :c2]
    b2 = p[r + 1:r + 2, :c3]
    bfc = p[r + 2:r + 3, :c4]
    bout = p[r + 3:r + 4, :]

    x = x_ref[...]                                                   # (tb, c1)
    h = jnp.maximum(jnp.dot(x, m1, preferred_element_type=jnp.float32) + b1, 0.0)
    h = jnp.maximum(jnp.dot(h, m2, preferred_element_type=jnp.float32) + b2, 0.0)
    h = jnp.maximum(jnp.dot(h, wfc, preferred_element_type=jnp.float32) + bfc, 0.0)
    q = jnp.dot(h, wout, preferred_element_type=jnp.float32) + bout  # (tb, 128)
    q_ref[...] = q.astype(q_ref.dtype)


# --------------------------- Operand preparation -----------------------------

def pack_geant2gcn_operands(params, adj, *, number_of_node, dim_input,
                            dim_output, max_tile_b=512):
    """One-time structural prep (amortized over forward calls in real use)."""
    w1, b1, w2, b2, wfc, bfc, wout, bout = params
    n = number_of_node
    c1 = n * dim_input               # slab width after flatten of (N, Din)
    c2 = n * w1.shape[1]             # N * 4
    c3 = n * dim_output              # fc1 fan-in
    c4 = wfc.shape[1]                # 64
    assert max(c1, c2, c3, c4, n) <= LANES, "toy-size layout assumes <=128 lanes"
    del dim_output

    # Fuse graph conv + per-node linear of each layer into one small matrix:
    #   (x_slab @ kron(adj.T, W))[b, n*dw + e] = ((adj @ X_b) @ W)[n, e]
    m1 = jnp.kron(adj.T, w1)                                   # (c1, c2)
    m2 = jnp.kron(adj.T, w2)                                   # (c2, c3)
    bb1 = jnp.tile(b1, (1, n))                                 # (1, c2)
    bb2 = jnp.tile(b2, (1, n))                                 # (1, c3)

    def lpad(a):
        return jnp.pad(a, ((0, 0), (0, LANES - a.shape[1])))

    p = jnp.concatenate(
        [lpad(m1), lpad(m2), lpad(wfc), lpad(wout),
         lpad(bb1), lpad(bb2), lpad(bfc), lpad(bout)], axis=0)
    rows_pad = pl.cdiv(p.shape[0], SUBLANES) * SUBLANES
    p = jnp.pad(p, ((0, rows_pad - p.shape[0]), (0, 0)))       # (rows_pad, 128)

    return dict(p=p, n=n, c1=c1, c2=c2, c3=c3, c4=c4, max_tile_b=max_tile_b)


# --------------------------------- Forward -----------------------------------

def geant2gcn_forward(ops, X):
    """X: (B, N*dim_input) -> q_values: (B, N)."""
    n, c1, c2, c3, c4 = ops["n"], ops["c1"], ops["c2"], ops["c3"], ops["c4"]
    p = ops["p"]
    B = X.shape[0]

    # Batch tiling: <=512-row tiles (well within every generation's VMEM),
    # padded so the grid divides evenly.
    tile_b = min(ops["max_tile_b"], pl.cdiv(B, SUBLANES) * SUBLANES)
    bp = pl.cdiv(B, tile_b) * tile_b
    xp = jnp.pad(X, ((0, bp - B), (0, 0)))                     # (bp, c1)

    kernel = functools.partial(geant2gcn_kernel, c1=c1, c2=c2, c3=c3, c4=c4)
    q_pad = pl.pallas_call(
        kernel,
        out_shape=jax.ShapeDtypeStruct((bp, LANES), jnp.float32),
        grid=(bp // tile_b,),
        in_specs=[
            pl.BlockSpec((tile_b, c1), lambda i: (i, 0)),      # batch-tiled X
            pl.BlockSpec(p.shape, lambda i: (0, 0)),           # params, resident
        ],
        out_specs=pl.BlockSpec((tile_b, LANES), lambda i: (i, 0)),
        compiler_params=pltpu.CompilerParams(
            dimension_semantics=("parallel",)),                # v7x: 2 TCs
    )(xp, p)
    return q_pad[:B, :n]


# ------------------------------ Parameter init --------------------------------

def init_params(key, number_of_node, dim_input, dim_output):
    """Deterministic init mimicking nn.Linear default U(-1/sqrt(fan_in), +)."""
    N, Din, Dout = number_of_node, dim_input, dim_output
    ks = jax.random.split(key, 8)

    def lin(kw, kb, fan_in, fan_out):
        bound = 1.0 / np.sqrt(fan_in)
        w = jax.random.uniform(kw, (fan_in, fan_out), jnp.float32, -bound, bound)
        b = jax.random.uniform(kb, (1, fan_out), jnp.float32, -bound, bound)
        return w, b

    w1, b1 = lin(ks[0], ks[1], Din, 4)               # node_update1
    w2, b2 = lin(ks[2], ks[3], 4, Dout)              # node_update2
    wfc, bfc = lin(ks[4], ks[5], N * Dout, 64)       # fc1
    wout, bout = lin(ks[6], ks[7], 64, N)            # out
    return (w1, b1, w2, b2, wfc, bfc, wout, bout)


# --------------------------------- Reference ----------------------------------

def reference_forward(params, X, adj, *, number_of_node, dim_input, dim_output):
    w1, b1, w2, b2, wfc, bfc, wout, bout = params
    B = X.shape[0]
    x = X.reshape(B, number_of_node, dim_input)
    x = jnp.maximum(jnp.einsum("nm,bmd->bnd", adj, x) @ w1 + b1, 0.0)
    x = jnp.maximum(jnp.einsum("nm,bmd->bnd", adj, x) @ w2 + b2, 0.0)
    x = x.reshape(B, -1)
    x = jnp.maximum(x @ wfc + bfc, 0.0)
    return x @ wout + bout


# ----------------------------------- Main --------------------------------------

if __name__ == "__main__":
    number_of_node = 8
    dim_input = 4
    dim_output = 4
    batch = 2

    key = jax.random.PRNGKey(0)
    k_param, k_x, k_adj = jax.random.split(key, 3)

    params = init_params(k_param, number_of_node, dim_input, dim_output)
    X = jax.random.normal(k_x, (batch, number_of_node * dim_input), jnp.float32)
    adj = jax.random.uniform(k_adj, (number_of_node, number_of_node), jnp.float32)

    ops = pack_geant2gcn_operands(
        params, adj,
        number_of_node=number_of_node,
        dim_input=dim_input,
        dim_output=dim_output)

    q = geant2gcn_forward(ops, X)
    q = jax.block_until_ready(q)

    q_ref = reference_forward(
        params, X, adj,
        number_of_node=number_of_node,
        dim_input=dim_input,
        dim_output=dim_output)
    q_ref = jax.block_until_ready(q_ref)

    np.testing.assert_allclose(np.asarray(q), np.asarray(q_ref),
                               rtol=1e-4, atol=1e-4)
    print("KERNEL_OK")
</pallas_src>

<mosaic_0001>
module attributes {stable_mosaic.version = 11 : i64} {
  func.func @geant2gcn_kernel(%arg0: i32, %arg1: memref<8x32xf32, #tpu.memory_space<vmem>>, %arg2: memref<168x128xf32, #tpu.memory_space<vmem>>, %arg3: memref<8x128xf32, #tpu.memory_space<vmem>>) attributes {dimension_semantics = [#tpu.dimension_semantics<parallel>], iteration_bounds = array<i64: 1>, scalar_prefetch = 0 : i64, scratch_operands = 0 : i64, tpu.core_type = #tpu.core_type<tc>, window_params = [{transform_indices = @transform_0, window_bounds = array<i64: 8, 32>}, {pipeline_mode = #tpu.pipeline_mode<synchronous>, transform_indices = @transform_1, window_bounds = array<i64: 168, 128>}, {transform_indices = @transform_2, window_bounds = array<i64: 8, 128>}]} {
    %c0 = arith.constant 0 : index
    %c0_0 = arith.constant 0 : index
    %0 = vector.load %arg2[%c0, %c0_0] : memref<168x128xf32, #tpu.memory_space<vmem>>, vector<168x128xf32>
    %1 = vector.extract_strided_slice %0 {offsets = [0, 0], sizes = [32, 32], strides = [1, 1]} : vector<168x128xf32> to vector<32x32xf32>
    %2 = vector.extract_strided_slice %0 {offsets = [32, 0], sizes = [32, 32], strides = [1, 1]} : vector<168x128xf32> to vector<32x32xf32>
    %3 = vector.extract_strided_slice %0 {offsets = [64, 0], sizes = [32, 64], strides = [1, 1]} : vector<168x128xf32> to vector<32x64xf32>
    %4 = vector.extract_strided_slice %0 {offsets = [96, 0], sizes = [64, 128], strides = [1, 1]} : vector<168x128xf32> to vector<64x128xf32>
    %5 = vector.extract_strided_slice %0 {offsets = [160, 0], sizes = [1, 32], strides = [1, 1]} : vector<168x128xf32> to vector<1x32xf32>
    %6 = vector.extract_strided_slice %0 {offsets = [161, 0], sizes = [1, 32], strides = [1, 1]} : vector<168x128xf32> to vector<1x32xf32>
    %7 = vector.extract_strided_slice %0 {offsets = [162, 0], sizes = [1, 64], strides = [1, 1]} : vector<168x128xf32> to vector<1x64xf32>
    %8 = vector.extract_strided_slice %0 {offsets = [163, 0], sizes = [1, 128], strides = [1, 1]} : vector<168x128xf32> to vector<1x128xf32>
    %c0_1 = arith.constant 0 : index
    %c0_2 = arith.constant 0 : index
    %9 = vector.load %arg1[%c0_1, %c0_2] : memref<8x32xf32, #tpu.memory_space<vmem>>, vector<8x32xf32>
    %cst = arith.constant dense<0.000000e+00> : vector<8x32xf32>
    %10 = tpu.matmul %9, %1, %cst {dimension_numbers = #tpu.dot_dimension_numbers<[1], [0], [0], [1], [0, 0, 1, 1], [], []>} : vector<8x32xf32>, vector<32x32xf32>, vector<8x32xf32> -> vector<8x32xf32>
    %11 = vector.broadcast %5 : vector<1x32xf32> to vector<8x32xf32>
    %12 = arith.addf %10, %11 : vector<8x32xf32>
    %cst_3 = arith.constant 0.000000e+00 : f32
    %13 = vector.broadcast %cst_3 : f32 to vector<8x32xf32>
    %14 = arith.maximumf %12, %13 : vector<8x32xf32>
    %cst_4 = arith.constant dense<0.000000e+00> : vector<8x32xf32>
    %15 = tpu.matmul %14, %2, %cst_4 {dimension_numbers = #tpu.dot_dimension_numbers<[1], [0], [0], [1], [0, 0, 1, 1], [], []>} : vector<8x32xf32>, vector<32x32xf32>, vector<8x32xf32> -> vector<8x32xf32>
    %16 = vector.broadcast %6 : vector<1x32xf32> to vector<8x32xf32>
    %17 = arith.addf %15, %16 : vector<8x32xf32>
    %cst_5 = arith.constant 0.000000e+00 : f32
    %18 = vector.broadcast %cst_5 : f32 to vector<8x32xf32>
    %19 = arith.maximumf %17, %18 : vector<8x32xf32>
    %cst_6 = arith.constant dense<0.000000e+00> : vector<8x64xf32>
    %20 = tpu.matmul %19, %3, %cst_6 {dimension_numbers = #tpu.dot_dimension_numbers<[1], [0], [0], [1], [0, 0, 1, 1], [], []>} : vector<8x32xf32>, vector<32x64xf32>, vector<8x64xf32> -> vector<8x64xf32>
    %21 = vector.broadcast %7 : vector<1x64xf32> to vector<8x64xf32>
    %22 = arith.addf %20, %21 : vector<8x64xf32>
    %cst_7 = arith.constant 0.000000e+00 : f32
    %23 = vector.broadcast %cst_7 : f32 to vector<8x64xf32>
    %24 = arith.maximumf %22, %23 : vector<8x64xf32>
    %cst_8 = arith.constant dense<0.000000e+00> : vector<8x128xf32>
    %25 = tpu.matmul %24, %4, %cst_8 {dimension_numbers = #tpu.dot_dimension_numbers<[1], [0], [0], [1], [0, 0, 1, 1], [], []>} : vector<8x64xf32>, vector<64x128xf32>, vector<8x128xf32> -> vector<8x128xf32>
    %26 = vector.broadcast %8 : vector<1x128xf32> to vector<8x128xf32>
    %27 = arith.addf %25, %26 : vector<8x128xf32>
    %c0_9 = arith.constant 0 : index
    %c0_10 = arith.constant 0 : index
    %28 = vector.load %arg3[%c0_9, %c0_10] : memref<8x128xf32, #tpu.memory_space<vmem>>, vector<8x128xf32>
    tpu.vector_store %arg3[%c0_9, %c0_10], %27 {strides = array<i32>} : memref<8x128xf32, #tpu.memory_space<vmem>>, vector<8x128xf32>,
    return
  }
  func.func @transform_0(%arg0: i32) -> (i32, i32) {
    %c0_i32 = arith.constant 0 : i32
    %c0_i32_0 = arith.constant 0 : i32
    return %arg0, %c0_i32 : i32, i32
  }
  func.func @transform_1(%arg0: i32) -> (i32, i32) {
    %c0_i32 = arith.constant 0 : i32
    %c0_i32_0 = arith.constant 0 : i32
    %c0_i32_1 = arith.constant 0 : i32
    return %c0_i32, %c0_i32_0 : i32, i32
  }
  func.func @transform_2(%arg0: i32) -> (i32, i32) {
    %c0_i32 = arith.constant 0 : i32
    %c0_i32_0 = arith.constant 0 : i32
    return %arg0, %c0_i32 : i32, i32
  }
}

</mosaic_0001>

<llo_original>
// kernel: tpu_custom_call.1
$region0: #{tpu_custom_call.1}
  #allocation0 [shape = 'u32[]', space=smem, size = 0x4, offset = 0x4, fixed_abs, tag = 'smem constant byte address 0x4 - core index']
  #allocation1 [shape = 'u32[144,128]{1,0:T(1,128)}', space=vmem, size = 0x12000, scoped, tag = 'internal scratch']
  %s0 = inlined_call_operand.hbm [shape: f32[8,32], index: 0, kind: input, shape index: {}]
  %s1 = inlined_call_operand.hbm [shape: f32[168,128], index: 1, kind: input, shape index: {}]
  %s2 = inlined_call_operand.hbm [shape: f32[8,128], index: 2, kind: output, shape index: {}]
  %s3 = sld [smem:[#allocation0]]
  $region26: #{tpu_custom_call.1} parent=0
    _
  %s5 = ssub.s32 1, %s3
  %s6 = scalar_select 0, %s5, %s3
  $region1: #{tpu_custom_call.1} parent=0
    #allocation2 [shape = 'u8[4096]{0}', space=vmem, size = 0x1000, scoped, tag = 'input window, operand 0, single buffered']
    #allocation3 [shape = 's32[1]{0}', space=sflag, size = 0x4, scoped, tag = 'scoped memory for tpu_custom_call.1']
    #allocation4 [shape = 's32[1]{0}', space=sflag, size = 0x4, scoped, tag = 'scoped memory for tpu_custom_call.1']
    #allocation5 [shape = 'u8[86016]{0}', space=vmem, size = 0x15000, scoped, tag = 'input window, operand 1, single buffered']
    #allocation6 [shape = 's32[1]{0}', space=sflag, size = 0x4, scoped, tag = 'scoped memory for tpu_custom_call.1']
    #allocation7 [shape = 'u8[4096]{0}', space=vmem, size = 0x1000, scoped, tag = 'output window, operand 0, single buffered']
    %7 = vsyncpa [#allocation3], 0
    %8 = vsyncpa [#allocation6], 0
    %9 = vsyncpa [#allocation4], 0
    // Predicated region
    $region2: #{tpu_custom_call.1} parent=1 // pred_check
      _
    $region3: #{tpu_custom_call.1} parent=1 // pred_check_branch
      %11 = sbr.rel (0) target = $region5
    $region4: #{tpu_custom_call.1} parent=1 // pred_region
      %s13 = ssub.s32 128, 128
      %14 = vsyncadd [#allocation3], %s13
      %s16 = sshll.u32 [#allocation2], 4
      %s17 = int_to_ptr.vmem [resolvable:$true] %s16
      %19 = dma.hbm_to_vmem [thread:$0]  %s0, 128, %s17, [#allocation3]
    $region5: #{tpu_custom_call.1} parent=1 // pred_fallthru
      _
    // Predicated region
    $region6: #{tpu_custom_call.1} parent=1 // pred_check
      _
    $region7: #{tpu_custom_call.1} parent=1 // pred_check_branch
      %21 = sbr.rel (0) target = $region9
    $region8: #{tpu_custom_call.1} parent=1 // pred_region
      %s23 = ssub.s32 2688, 2688
      %24 = vsyncadd [#allocation6], %s23
      %s25 = sshll.u32 [#allocation5], 4
      %s26 = int_to_ptr.vmem [resolvable:$true] %s25
      %31 = dma.hbm_to_vmem [thread:$0]  %s1, 2688, %s26, [#allocation6], 128, 128, 8
    $region9: #{tpu_custom_call.1} parent=1 // pred_fallthru
      _
    // Predicated region
    $region10: #{tpu_custom_call.1} parent=1 // pred_check
      _
    $region11: #{tpu_custom_call.1} parent=1 // pred_check_branch
      %33 = sbr.rel (0) target = $region13
    $region12: #{tpu_custom_call.1} parent=1 // pred_region
      %34 = dma.done [#allocation3], 128
    $region13: #{tpu_custom_call.1} parent=1 // pred_fallthru
      _
    // Predicated region
    $region14: #{tpu_custom_call.1} parent=1 // pred_check
      _
    $region15: #{tpu_custom_call.1} parent=1 // pred_check_branch
      %36 = sbr.rel (0) target = $region17
    $region16: #{tpu_custom_call.1} parent=1 // pred_region
      %37 = dma.done [#allocation6], 2688
    $region17: #{tpu_custom_call.1} parent=1 // pred_fallthru
      _
    %v38 = vld [vmem:[#allocation5] sm:$0xff]
    %v39 = vld [vmem:[#allocation5 + $0x8] sm:$0xff]
    %v40 = vld [vmem:[#allocation5 + $0x10] sm:$0xff]
    %v41 = vld [vmem:[#allocation5 + $0x18] sm:$0xff]
    %v42 = vld [vmem:[#allocation5 + $0x20] sm:$0xff]
    %v43 = vld [vmem:[#allocation5 + $0x28] sm:$0xff]
    %v44 = vld [vmem:[#allocation5 + $0x30] sm:$0xff]
    %v45 = vld [vmem:[#allocation5 + $0x38] sm:$0xff]
    %v46 = vld [vmem:[#allocation5 + $0x40] sm:$0xff]
    %v47 = vld [vmem:[#allocation5 + $0x48] sm:$0xff]
    %v48 = vld [vmem:[#allocation5 + $0x50] sm:$0xff]
    %v49 = vld [vmem:[#allocation5 + $0x58] sm:$0xff]
    %v50 = vld [vmem:[#allocation5 + $0x60] sm:$0xff]
    %v51 = vld [vmem:[#allocation5 + $0x68] sm:$0xff]
    %v52 = vld [vmem:[#allocation5 + $0x70] sm:$0xff]
    %v53 = vld [vmem:[#allocation5 + $0x78] sm:$0xff]
    %v54 = vld [vmem:[#allocation5 + $0x80] sm:$0xff]
    %v55 = vld [vmem:[#allocation5 + $0x88] sm:$0xff]
    %v56 = vld [vmem:[#allocation5 + $0x90] sm:$0xff]
    %v57 = vld [vmem:[#allocation5 + $0x98] sm:$0xff]
    %v58 = vld [vmem:[#allocation5 + $0xa0] sm:$0xff]
    %v59 = vld [vmem:[#allocation2] sm:$0xff]
    %v60 = vlaneseq
    %v61 = vshrl.u32 %v60, 7
    %v62 = vsub.s32 0, %v61
    %v63 = vrot.slane %v58, %v62
    %vm64 = vcmask 261120
    %v66 = vsel %vm64, %v59, 0
    %68 = vmatprep.subr.mxu0 0.0
    %69 = vmatpush1.msra.mxu0 %v38
    %70 = vmatprep.subr.mxu0 0.0
    %71 = vmatpush1.msra.mxu0 %v39
    %72 = vmatprep.subr.mxu0 0.0
    %73 = vmatpush1.msra.mxu0 %v40
    %74 = vmatprep.subr.mxu0 0.0
    %75 = vmatpush1.msra.mxu0 %v41
    %76 = vmatprep.subr.mxu0 0.0
    %77 = vmatpush1.msra.mxu0 0.0
    %78 = vmatprep.subr.mxu0 0.0
    %79 = vmatpush1.msra.mxu0 0.0
    %80 = vmatprep.subr.mxu0 0.0
    %81 = vmatpush1.msra.mxu0 0.0
    %82 = vmatprep.subr.mxu0 0.0
    %83 = vmatpush1.msra.mxu0 0.0
    %84 = vmatprep.subr.mxu0 0.0
    %85 = vmatpush1.msra.mxu0 0.0
    %86 = vmatprep.subr.mxu0 0.0
    %87 = vmatpush1.msra.mxu0 0.0
    %88 = vmatprep.subr.mxu0 0.0
    %89 = vmatpush1.msra.mxu0 0.0
    %90 = vmatprep.subr.mxu0 0.0
    %91 = vmatpush1.msra.mxu0 0.0
    %92 = vmatprep.subr.mxu0 0.0
    %93 = vmatpush1.msra.mxu0 0.0
    %94 = vmatprep.subr.mxu0 0.0
    %95 = vmatpush1.msra.mxu0 0.0
    %96 = vmatprep.subr.mxu0 0.0
    %97 = vmatpush1.msra.mxu0 0.0
    %98 = vmatprep.subr.mxu0 0.0
    %99 = vmatpush1.msra.mxu0 0.0
    %100 = vmatprep.subr.mxu0 0.0
    %101 = vmatpush1.msra.mxu0 0.0
    %102 = vmatprep.subr.mxu0 0.0
    %103 = vmatpush1.msra.mxu0 0.0
    %104 = vmatprep.subr.mxu0 0.0
    %105 = vmatpush1.msra.mxu0 0.0
    %106 = vmatprep.subr.mxu0 0.0
    %107 = vmatpush1.msra.mxu0 0.0
    %108 = vmatprep.subr.mxu0 0.0
    %109 = vmatpush1.msra.mxu0 0.0
    %110 = vmatprep.subr.mxu0 0.0
    %111 = vmatpush1.msra.mxu0 0.0
    %112 = vmatprep.subr.mxu0 0.0
    %113 = vmatpush1.msra.mxu0 0.0
    %114 = vmatprep.subr.mxu0 0.0
    %115 = vmatpush1.msra.mxu0 0.0
    %116 = vmatprep.subr.mxu0 0.0
    %117 = vmatpush1.msra.mxu0 0.0
    %118 = vmatprep.subr.mxu0 0.0
    %119 = vmatpush1.msra.mxu0 0.0
    %120 = vmatprep.subr.mxu0 0.0
    %121 = vmatpush1.msra.mxu0 0.0
    %122 = vmatprep.subr.mxu0 0.0
    %123 = vmatpush1.msra.mxu0 0.0
    %124 = vmatprep.subr.mxu0 0.0
    %125 = vmatpush1.msra.mxu0 0.0
    %126 = vmatprep.subr.mxu0 0.0
    %127 = vmatpush1.msra.mxu0 0.0
    %128 = vmatprep.subr.mxu0 0.0
    %129 = vmatpush1.msra.mxu0 0.0
    %130 = vmatprep.subr.mxu0 0.0
    %131 = vmatpush1.msra.mxu0 0.0
    %132 = vmatprep.mubr.f32.mxu0 0.0
    %133 = vmatmul.mubr.f32.gmra.mrb[0].mxu0 %v66
    %v134 = vpop.f32.mrb[0].mxu0
    %v135 = vadd.f32 %v63, %v134
    %v136 = vpop.f32.mrb[0].mxu0
    %137 = vdwg.mxu0
    %v138 = vmax.f32 %v135, 0.0
    %v139 = vlaneseq
    %v140 = vshrl.u32 %v139, 7
    %v141 = vsub.s32 1, %v140
    %v142 = vrot.slane %v58, %v141
    %v144 = vsel %vm64, %v138, 0
    %146 = vmatprep.subr.mxu0 0.0
    %147 = vmatpush1.msra.mxu0 %v42
    %148 = vmatprep.subr.mxu0 0.0
    %149 = vmatpush1.msra.mxu0 %v43
    %150 = vmatprep.subr.mxu0 0.0
    %151 = vmatpush1.msra.mxu0 %v44
    %152 = vmatprep.subr.mxu0 0.0
    %153 = vmatpush1.msra.mxu0 %v45
    %154 = vmatprep.subr.mxu0 0.0
    %155 = vmatpush1.msra.mxu0 0.0
    %156 = vmatprep.subr.mxu0 0.0
    %157 = vmatpush1.msra.mxu0 0.0
    %158 = vmatprep.subr.mxu0 0.0
    %159 = vmatpush1.msra.mxu0 0.0
    %160 = vmatprep.subr.mxu0 0.0
    %161 = vmatpush1.msra.mxu0 0.0
    %162 = vmatprep.subr.mxu0 0.0
    %163 = vmatpush1.msra.mxu0 0.0
    %164 = vmatprep.subr.mxu0 0.0
    %165 = vmatpush1.msra.mxu0 0.0
    %166 = vmatprep.subr.mxu0 0.0
    %167 = vmatpush1.msra.mxu0 0.0
    %168 = vmatprep.subr.mxu0 0.0
    %169 = vmatpush1.msra.mxu0 0.0
    %170 = vmatprep.subr.mxu0 0.0
    %171 = vmatpush1.msra.mxu0 0.0
    %172 = vmatprep.subr.mxu0 0.0
    %173 = vmatpush1.msra.mxu0 0.0
    %174 = vmatprep.subr.mxu0 0.0
    %175 = vmatpush1.msra.mxu0 0.0
    %176 = vmatprep.subr.mxu0 0.0
    %177 = vmatpush1.msra.mxu0 0.0
    %178 = vmatprep.subr.mxu0 0.0
    %179 = vmatpush1.msra.mxu0 0.0
    %180 = vmatprep.subr.mxu0 0.0
    %181 = vmatpush1.msra.mxu0 0.0
    %182 = vmatprep.subr.mxu0 0.0
    %183 = vmatpush1.msra.mxu0 0.0
    %184 = vmatprep.subr.mxu0 0.0
    %185 = vmatpush1.msra.mxu0 0.0
    %186 = vmatprep.subr.mxu0 0.0
    %187 = vmatpush1.msra.mxu0 0.0
    %188 = vmatprep.subr.mxu0 0.0
    %189 = vmatpush1.msra.mxu0 0.0
    %190 = vmatprep.subr.mxu0 0.0
    %191 = vmatpush1.msra.mxu0 0.0
    %192 = vmatprep.subr.mxu0 0.0
    %193 = vmatpush1.msra.mxu0 0.0
    %194 = vmatprep.subr.mxu0 0.0
    %195 = vmatpush1.msra.mxu0 0.0
    %196 = vmatprep.subr.mxu0 0.0
    %197 = vmatpush1.msra.mxu0 0.0
    %198 = vmatprep.subr.mxu0 0.0
    %199 = vmatpush1.msra.mxu0 0.0
    %200 = vmatprep.subr.mxu0 0.0
    %201 = vmatpush1.msra.mxu0 0.0
    %202 = vmatprep.subr.mxu0 0.0
    %203 = vmatpush1.msra.mxu0 0.0
    %204 = vmatprep.subr.mxu0 0.0
    %205 = vmatpush1.msra.mxu0 0.0
    %206 = vmatprep.subr.mxu0 0.0
    %207 = vmatpush1.msra.mxu0 0.0
    %208 = vmatprep.subr.mxu0 0.0
    %209 = vmatpush1.msra.mxu0 0.0
    %210 = vmatprep.mubr.f32.mxu0 0.0
    %211 = vmatmul.mubr.f32.gmra.mrb[0].mxu0 %v144
    %v212 = vpop.f32.mrb[0].mxu0
    %v213 = vadd.f32 %v142, %v212
    %v214 = vpop.f32.mrb[0].mxu0
    %215 = vdwg.mxu0
    %v216 = vmax.f32 %v213, 0.0
    %v217 = vlaneseq
    %v218 = vshrl.u32 %v217, 7
    %v219 = vsub.s32 2, %v218
    %v220 = vrot.slane %v58, %v219
    %v222 = vsel %vm64, %v216, 0
    %224 = vmatprep.subr.mxu0 0.0
    %225 = vmatpush1.msra.mxu0 %v46
    %226 = vmatprep.subr.mxu0 0.0
    %227 = vmatpush1.msra.mxu0 %v47
    %228 = vmatprep.subr.mxu0 0.0
    %229 = vmatpush1.msra.mxu0 %v48
    %230 = vmatprep.subr.mxu0 0.0
    %231 = vmatpush1.msra.mxu0 %v49
    %232 = vmatprep.subr.mxu0 0.0
    %233 = vmatpush1.msra.mxu0 0.0
    %234 = vmatprep.subr.mxu0 0.0
    %235 = vmatpush1.msra.mxu0 0.0
    %236 = vmatprep.subr.mxu0 0.0
    %237 = vmatpush1.msra.mxu0 0.0
    %238 = vmatprep.subr.mxu0 0.0
    %239 = vmatpush1.msra.mxu0 0.0
    %240 = vmatprep.subr.mxu0 0.0
    %241 = vmatpush1.msra.mxu0 0.0
    %242 = vmatprep.subr.mxu0 0.0
    %243 = vmatpush1.msra.mxu0 0.0
    %244 = vmatprep.subr.mxu0 0.0
    %245 = vmatpush1.msra.mxu0 0.0
    %246 = vmatprep.subr.mxu0 0.0
    %247 = vmatpush1.msra.mxu0 0.0
    %248 = vmatprep.subr.mxu0 0.0
    %249 = vmatpush1.msra.mxu0 0.0
    %250 = vmatprep.subr.mxu0 0.0
    %251 = vmatpush1.msra.mxu0 0.0
    %252 = vmatprep.subr.mxu0 0.0
    %253 = vmatpush1.msra.mxu0 0.0
    %254 = vmatprep.subr.mxu0 0.0
    %255 = vmatpush1.msra.mxu0 0.0
    %256 = vmatprep.subr.mxu0 0.0
    %257 = vmatpush1.msra.mxu0 0.0
    %258 = vmatprep.subr.mxu0 0.0
    %259 = vmatpush1.msra.mxu0 0.0
    %260 = vmatprep.subr.mxu0 0.0
    %261 = vmatpush1.msra.mxu0 0.0
    %262 = vmatprep.subr.mxu0 0.0
    %263 = vmatpush1.msra.mxu0 0.0
    %264 = vmatprep.subr.mxu0 0.0
    %265 = vmatpush1.msra.mxu0 0.0
    %266 = vmatprep.subr.mxu0 0.0
    %267 = vmatpush1.msra.mxu0 0.0
    %268 = vmatprep.subr.mxu0 0.0
    %269 = vmatpush1.msra.mxu0 0.0
    %270 = vmatprep.subr.mxu0 0.0
    %271 = vmatpush1.msra.mxu0 0.0
    %272 = vmatprep.subr.mxu0 0.0
    %273 = vmatpush1.msra.mxu0 0.0
    %274 = vmatprep.subr.mxu0 0.0
    %275 = vmatpush1.msra.mxu0 0.0
    %276 = vmatprep.subr.mxu0 0.0
    %277 = vmatpush1.msra.mxu0 0.0
    %278 = vmatprep.subr.mxu0 0.0
    %279 = vmatpush1.msra.mxu0 0.0
    %280 = vmatprep.subr.mxu0 0.0
    %281 = vmatpush1.msra.mxu0 0.0
    %282 = vmatprep.subr.mxu0 0.0
    %283 = vmatpush1.msra.mxu0 0.0
    %284 = vmatprep.subr.mxu0 0.0
    %285 = vmatpush1.msra.mxu0 0.0
    %286 = vmatprep.subr.mxu0 0.0
    %287 = vmatpush1.msra.mxu0 0.0
    %288 = vmatprep.mubr.f32.mxu0 0.0
    %289 = vmatmul.mubr.f32.gmra.mrb[0].mxu0 %v222
    %v290 = vpop.f32.mrb[0].mxu0
    %v291 = vadd.f32 %v220, %v290
    %v292 = vpop.f32.mrb[0].mxu0
    %293 = vdwg.mxu0
    %v294 = vmax.f32 %v291, 0.0
    %v295 = vlaneseq
    %v296 = vshrl.u32 %v295, 7
    %v297 = vsub.s32 3, %v296
    %v298 = vrot.slane %v58, %v297
    %vm299 = vcmask 523264
    %v301 = vsel %vm299, %v294, 0
    %303 = vmatprep.subr.mxu0 0.0
    %304 = vmatpush1.msra.mxu0 %v50
    %305 = vmatprep.subr.mxu0 0.0
    %306 = vmatpush1.msra.mxu0 %v51
    %307 = vmatprep.subr.mxu0 0.0
    %308 = vmatpush1.msra.mxu0 %v52
    %309 = vmatprep.subr.mxu0 0.0
    %310 = vmatpush1.msra.mxu0 %v53
    %311 = vmatprep.subr.mxu0 0.0
    %312 = vmatpush1.msra.mxu0 %v54
    %313 = vmatprep.subr.mxu0 0.0
    %314 = vmatpush1.msra.mxu0 %v55
    %315 = vmatprep.subr.mxu0 0.0
    %316 = vmatpush1.msra.mxu0 %v56
    %317 = vmatprep.subr.mxu0 0.0
    %318 = vmatpush1.msra.mxu0 %v57
    %319 = vmatprep.subr.mxu0 0.0
    %320 = vmatpush1.msra.mxu0 0.0
    %321 = vmatprep.subr.mxu0 0.0
    %322 = vmatpush1.msra.mxu0 0.0
    %323 = vmatprep.subr.mxu0 0.0
    %324 = vmatpush1.msra.mxu0 0.0
    %325 = vmatprep.subr.mxu0 0.0
    %326 = vmatpush1.msra.mxu0 0.0
    %327 = vmatprep.subr.mxu0 0.0
    %328 = vmatpush1.msra.mxu0 0.0
    %329 = vmatprep.subr.mxu0 0.0
    %330 = vmatpush1.msra.mxu0 0.0
    %331 = vmatprep.subr.mxu0 0.0
    %332 = vmatpush1.msra.mxu0 0.0
    %333 = vmatprep.subr.mxu0 0.0
    %334 = vmatpush1.msra.mxu0 0.0
    %335 = vmatprep.subr.mxu0 0.0
    %336 = vmatpush1.msra.mxu0 0.0
    %337 = vmatprep.subr.mxu0 0.0
    %338 = vmatpush1.msra.mxu0 0.0
    %339 = vmatprep.subr.mxu0 0.0
    %340 = vmatpush1.msra.mxu0 0.0
    %341 = vmatprep.subr.mxu0 0.0
    %342 = vmatpush1.msra.mxu0 0.0
    %343 = vmatprep.subr.mxu0 0.0
    %344 = vmatpush1.msra.mxu0 0.0
    %345 = vmatprep.subr.mxu0 0.0
    %346 = vmatpush1.msra.mxu0 0.0
    %347 = vmatprep.subr.mxu0 0.0
    %348 = vmatpush1.msra.mxu0 0.0
    %349 = vmatprep.subr.mxu0 0.0
    %350 = vmatpush1.msra.mxu0 0.0
    %351 = vmatprep.subr.mxu0 0.0
    %352 = vmatpush1.msra.mxu0 0.0
    %353 = vmatprep.subr.mxu0 0.0
    %354 = vmatpush1.msra.mxu0 0.0
    %355 = vmatprep.subr.mxu0 0.0
    %356 = vmatpush1.msra.mxu0 0.0
    %357 = vmatprep.subr.mxu0 0.0
    %358 = vmatpush1.msra.mxu0 0.0
    %359 = vmatprep.subr.mxu0 0.0
    %360 = vmatpush1.msra.mxu0 0.0
    %361 = vmatprep.subr.mxu0 0.0
    %362 = vmatpush1.msra.mxu0 0.0
    %363 = vmatprep.subr.mxu0 0.0
    %364 = vmatpush1.msra.mxu0 0.0
    %365 = vmatprep.subr.mxu0 0.0
    %366 = vmatpush1.msra.mxu0 0.0
    %367 = vmatprep.mubr.f32.mxu0 0.0
    %368 = vmatmul.mubr.f32.gmra.mrb[0].mxu0 %v301
    %v369 = vpop.f32.mrb[0].mxu0
    %v370 = vadd.f32 %v298, %v369
    %v371 = vpop.f32.mrb[0].mxu0
    %372 = vdwg.mxu0
    %373 = vst [vmem:[#allocation7] sm:$0xff] %v370
    // Predicated region
    $region18: #{tpu_custom_call.1} parent=1 // pred_check
      _
    $region19: #{tpu_custom_call.1} parent=1 // pred_check_branch
      %375 = sbr.rel (0) target = $region21
    $region20: #{tpu_custom_call.1} parent=1 // pred_region
      %s377 = ssub.s32 128, 128
      %378 = vsyncadd [#allocation4], %s377
      %s380 = sshll.u32 [#allocation7], 4
      %s381 = int_to_ptr.vmem [resolvable:$true] %s380
      %383 = dma.vmem_to_hbm [thread:$0]  %s381, 128, %s2, [#allocation4]
    $region21: #{tpu_custom_call.1} parent=1 // pred_fallthru
      _
    // Predicated region
    $region22: #{tpu_custom_call.1} parent=1 // pred_check
      _
    $region23: #{tpu_custom_call.1} parent=1 // pred_check_branch
      %385 = sbr.rel (0) target = $region25
    $region24: #{tpu_custom_call.1} parent=1 // pred_region
      %386 = dma.done [#allocation4], 128
    $region25: #{tpu_custom_call.1} parent=1 // pred_fallthru
      _
    %387 = vsyncpa [#allocation3], 1
    %388 = vsyncpa [#allocation6], 1
    %389 = vsyncpa [#allocation4], 1

</llo_original>
